<compile_context>
chip_gen: v7x
topology: tpu7x:2x2x1
jax: 0.10.0
libtpu: 0.0.40
codegen_flags: <defaults>
</compile_context>

<pallas_src>
import functools
import math

import jax
import jax.numpy as jnp
from jax.experimental import pallas as pl
from jax.experimental.pallas import tpu as pltpu


def _round_up(x, m):
    return (x + m - 1) // m * m


# ----------------------------------------------------------------------------
# Kernel
# ----------------------------------------------------------------------------
def _mlp_kernel(x_ref, w1_ref, b1_ref, w2_ref, b2_ref, o_ref):
    # x streams per batch tile; cast to the compute dtype in-kernel (cheaper
    # than an extra wrapper-side astype pass over x in HBM).
    x = x_ref[...].astype(w1_ref.dtype)

    # Weight-norm scales are pre-folded into w1/w2 (prepare_params), so the
    # body is just relu(x@W1 + b1) @ W2 + b2 with f32 MXU accumulation and
    # f32 bias adds on the accumulator.
    h = jnp.dot(x, w1_ref[...], preferred_element_type=jnp.float32)
    h = jnp.maximum(h + b1_ref[...], 0.0)

    # TODO(synk): dropout between the layers is identity at inference time.

    y = jnp.dot(h.astype(w2_ref.dtype), w2_ref[...],
                preferred_element_type=jnp.float32)
    o_ref[...] = (y + b2_ref[...]).astype(o_ref.dtype)


# ----------------------------------------------------------------------------
# One-time parameter preparation (outside the per-call forward path)
# ----------------------------------------------------------------------------
def prepare_params(v1, g1, b1, v2, g2, b2, *, compute_dtype=jnp.bfloat16,
                   out_dtype=None, pad_out=False):
    """v1: (hid, in), v2: (out, hid) in PyTorch Linear layout; g1/g2 scalars.

    One-time prep: folds the weight_norm(dim=None) scales g/||V||_F into the
    weights, transposes to (in, hid)/(hid, out) for the MXU, zero-pads the
    hidden axis to a multiple of 128 (lane-dense intermediate; padded b1 lanes
    are 0 so relu(0)=0 contributes nothing), and leaves the output axis
    unpadded by default to minimize HBM writeback bytes.
    """
    hid, in_dim = v1.shape
    out_dim = v2.shape[0]
    hid_p = _round_up(hid, 128)
    out_p = _round_up(out_dim, 128) if pad_out else out_dim
    if out_dtype is None:
        out_dtype = compute_dtype

    s1 = (g1 / jnp.linalg.norm(v1)).astype(jnp.float32)
    s2 = (g2 / jnp.linalg.norm(v2)).astype(jnp.float32)

    w1t = jnp.zeros((in_dim, hid_p), compute_dtype).at[:, :hid].set(
        (s1 * v1.T).astype(compute_dtype))
    w2t = jnp.zeros((hid_p, out_p), compute_dtype).at[:hid, :out_dim].set(
        (s2 * v2.T).astype(compute_dtype))
    # Biases stay f32 (added on the f32 accumulator).
    b1p = jnp.zeros((1, hid_p), jnp.float32).at[:, :hid].set(
        b1.astype(jnp.float32))
    b2p = jnp.zeros((1, out_p), jnp.float32).at[:, :out_dim].set(
        b2.astype(jnp.float32))

    return dict(w1t=w1t, b1=b1p, w2t=w2t, b2=b2p,
                out_dim=out_dim, out_dtype=jnp.dtype(out_dtype))


# ----------------------------------------------------------------------------
# Jitted forward
# ----------------------------------------------------------------------------
@functools.partial(jax.jit, static_argnames=("out_dtype", "tile_b"))
def _forward_jit(x, w1t, b1, w2t, b2, *, out_dtype, tile_b):
    B, in_dim = x.shape
    hid_p = w1t.shape[1]
    n_out = w2t.shape[1]

    # cdiv grid: no wrapper-side jnp.pad over x; the ragged tail block is
    # handled by Pallas (garbage tail rows only affect their own masked-out
    # output rows since the computation is row-wise independent).
    grid = (pl.cdiv(B, tile_b),)

    x_bytes = jnp.dtype(x.dtype).itemsize
    w_bytes = jnp.dtype(w1t.dtype).itemsize
    o_bytes = jnp.dtype(out_dtype).itemsize
    cost = pl.CostEstimate(
        flops=2 * B * (in_dim * hid_p + hid_p * n_out),
        transcendentals=0,
        bytes_accessed=(x.size * x_bytes
                        + (w1t.size + w2t.size) * w_bytes
                        + (b1.size + b2.size) * 4
                        + B * n_out * o_bytes))

    return pl.pallas_call(
        _mlp_kernel,
        out_shape=jax.ShapeDtypeStruct((B, n_out), out_dtype),
        grid=grid,
        in_specs=[
            pl.BlockSpec((tile_b, in_dim), lambda i: (i, 0)),   # x streams
            pl.BlockSpec((in_dim, hid_p), lambda i: (0, 0)),    # weights resident
            pl.BlockSpec((1, hid_p), lambda i: (0, 0)),
            pl.BlockSpec((hid_p, n_out), lambda i: (0, 0)),
            pl.BlockSpec((1, n_out), lambda i: (0, 0)),
        ],
        out_specs=pl.BlockSpec((tile_b, n_out), lambda i: (i, 0)),
        compiler_params=pltpu.CompilerParams(
            dimension_semantics=("parallel",),          # megacore batch sharding
            vmem_limit_bytes=32 * 1024 * 1024),         # headroom over v5e default
        cost_estimate=cost,
    )(x, w1t, b1, w2t, b2)


def _pick_tile_b(B):
    if B <= 8:
        return B  # single full block; avoids sub-8 sublane block shapes
    # Keep >= 2 grid steps (v7x has 2 TensorCores to shard across) and cap the
    # tile at 4096 rows: big enough to amortize the ~0.35us/step grid overhead,
    # small enough that double-buffered x/out tiles stay well under 32MiB VMEM.
    return max(8, min(4096, _round_up(pl.cdiv(B, 2), 8)))


def weight_norm_mlp_forward(x, params, *, tile_b=None):
    """x: (B, in_dim) -> (B, out_dim)."""
    if tile_b is None:
        tile_b = _pick_tile_b(x.shape[0])
    out = _forward_jit(x, params["w1t"], params["b1"], params["w2t"],
                       params["b2"], out_dtype=params["out_dtype"],
                       tile_b=int(tile_b))
    if out.shape[1] != params["out_dim"]:   # only when pad_out=True
        out = out[:, :params["out_dim"]]
    return out


# ----------------------------------------------------------------------------
# Pure-JAX reference
# ----------------------------------------------------------------------------
def _reference(x, v1, g1, b1, v2, g2, b2):
    w1 = g1 * v1 / jnp.linalg.norm(v1)
    w2 = g2 * v2 / jnp.linalg.norm(v2)
    h = jnp.maximum(x @ w1.T + b1, 0.0)
    return h @ w2.T + b2


if __name__ == "__main__":
    # Small shapes consistent with the module: batch=32, in=32, hid=64, out=16.
    B, IN, HID, OUT = 32, 32, 64, 16
    key = jax.random.PRNGKey(0)
    kx, kv1, kb1, kv2, kb2 = jax.random.split(key, 5)

    x = jax.random.normal(kx, (B, IN), dtype=jnp.float32)

    bound1 = 1.0 / math.sqrt(IN)
    v1 = jax.random.uniform(kv1, (HID, IN), minval=-bound1, maxval=bound1,
                            dtype=jnp.float32)
    b1 = jax.random.uniform(kb1, (HID,), minval=-bound1, maxval=bound1,
                            dtype=jnp.float32)
    g1 = jnp.linalg.norm(v1)          # weight_norm init: g = ||v||_F (dim=None)

    bound2 = 1.0 / math.sqrt(HID)
    v2 = jax.random.uniform(kv2, (OUT, HID), minval=-bound2, maxval=bound2,
                            dtype=jnp.float32)
    b2 = jax.random.uniform(kb2, (OUT,), minval=-bound2, maxval=bound2,
                            dtype=jnp.float32)
    g2 = jnp.linalg.norm(v2)

    ref = _reference(x, v1, g1, b1, v2, g2, b2)

    # f32 path: tile heuristic gives tile_b=16 -> 2 grid steps, exercising the
    # streamed x/out BlockSpecs and VMEM-resident weights.
    params_f32 = prepare_params(v1, g1, b1, v2, g2, b2,
                                compute_dtype=jnp.float32)
    out_f32 = jax.block_until_ready(weight_norm_mlp_forward(x, params_f32))
    assert out_f32.shape == (B, OUT)
    assert jnp.allclose(out_f32, ref, atol=1e-4, rtol=1e-4), \
        "Pallas f32 output mismatch vs reference"

    # Ragged batch (B=28, tile_b=16 -> 2 steps, last block masked): verifies
    # the cdiv grid without any wrapper-side padding of x.
    Br = 28
    out_ragged = jax.block_until_ready(
        weight_norm_mlp_forward(x[:Br], params_f32))
    assert out_ragged.shape == (Br, OUT)
    assert jnp.allclose(out_ragged, ref[:Br], atol=1e-4, rtol=1e-4), \
        "Pallas ragged-grid output mismatch vs reference"

    # Default path: bf16 operands + bf16 output, f32 MXU accumulation,
    # in-kernel cast of the streamed f32 x tile.
    params_bf16 = prepare_params(v1, g1, b1, v2, g2, b2)   # bf16 default
    out_bf16 = jax.block_until_ready(weight_norm_mlp_forward(x, params_bf16))
    assert out_bf16.shape == (B, OUT)
    assert out_bf16.dtype == jnp.bfloat16
    assert jnp.allclose(out_bf16.astype(jnp.float32), ref,
                        atol=7e-2, rtol=7e-2), \
        "Pallas bf16 output mismatch vs reference"

    print("KERNEL_OK")
</pallas_src>

<mosaic_0001>
module attributes {stable_mosaic.version = 11 : i64} {
  func.func @_mlp_kernel(%arg0: i32, %arg1: memref<16x32xf32, #tpu.memory_space<vmem>>, %arg2: memref<32x128xf32, #tpu.memory_space<vmem>>, %arg3: memref<1x128xf32, #tpu.memory_space<vmem>>, %arg4: memref<128x16xf32, #tpu.memory_space<vmem>>, %arg5: memref<1x16xf32, #tpu.memory_space<vmem>>, %arg6: memref<16x16xf32, #tpu.memory_space<vmem>>) attributes {dimension_semantics = [#tpu.dimension_semantics<parallel>], iteration_bounds = array<i64: 2>, scalar_prefetch = 0 : i64, scratch_operands = 0 : i64, tpu.core_type = #tpu.core_type<tc>, window_params = [{transform_indices = @transform_0, window_bounds = array<i64: 16, 32>}, {pipeline_mode = #tpu.pipeline_mode<synchronous>, transform_indices = @transform_1, window_bounds = array<i64: 32, 128>}, {pipeline_mode = #tpu.pipeline_mode<synchronous>, transform_indices = @transform_2, window_bounds = array<i64: 1, 128>}, {pipeline_mode = #tpu.pipeline_mode<synchronous>, transform_indices = @transform_3, window_bounds = array<i64: 128, 16>}, {pipeline_mode = #tpu.pipeline_mode<synchronous>, transform_indices = @transform_4, window_bounds = array<i64: 1, 16>}, {transform_indices = @transform_5, window_bounds = array<i64: 16, 16>}]} {
    %c0 = arith.constant 0 : index
    %c0_0 = arith.constant 0 : index
    %0 = vector.load %arg1[%c0, %c0_0] : memref<16x32xf32, #tpu.memory_space<vmem>>, vector<16x32xf32>
    %c0_1 = arith.constant 0 : index
    %c0_2 = arith.constant 0 : index
    %1 = vector.load %arg2[%c0_1, %c0_2] : memref<32x128xf32, #tpu.memory_space<vmem>>, vector<32x128xf32>
    %cst = arith.constant dense<0.000000e+00> : vector<16x128xf32>
    %2 = tpu.matmul %0, %1, %cst {dimension_numbers = #tpu.dot_dimension_numbers<[1], [0], [0], [1], [0, 0, 1, 1], [], []>} : vector<16x32xf32>, vector<32x128xf32>, vector<16x128xf32> -> vector<16x128xf32>
    %c0_3 = arith.constant 0 : index
    %c0_4 = arith.constant 0 : index
    %3 = vector.load %arg3[%c0_3, %c0_4] : memref<1x128xf32, #tpu.memory_space<vmem>>, vector<1x128xf32>
    %4 = vector.broadcast %3 : vector<1x128xf32> to vector<16x128xf32>
    %5 = arith.addf %2, %4 : vector<16x128xf32>
    %cst_5 = arith.constant 0.000000e+00 : f32
    %6 = vector.broadcast %cst_5 : f32 to vector<16x128xf32>
    %7 = arith.maximumf %5, %6 : vector<16x128xf32>
    %c0_6 = arith.constant 0 : index
    %c0_7 = arith.constant 0 : index
    %8 = vector.load %arg4[%c0_6, %c0_7] : memref<128x16xf32, #tpu.memory_space<vmem>>, vector<128x16xf32>
    %cst_8 = arith.constant dense<0.000000e+00> : vector<16x16xf32>
    %9 = tpu.matmul %7, %8, %cst_8 {dimension_numbers = #tpu.dot_dimension_numbers<[1], [0], [0], [1], [0, 0, 1, 1], [], []>} : vector<16x128xf32>, vector<128x16xf32>, vector<16x16xf32> -> vector<16x16xf32>
    %c0_9 = arith.constant 0 : index
    %c0_10 = arith.constant 0 : index
    %10 = vector.load %arg5[%c0_9, %c0_10] : memref<1x16xf32, #tpu.memory_space<vmem>>, vector<1x16xf32>
    %11 = vector.broadcast %10 : vector<1x16xf32> to vector<16x16xf32>
    %12 = arith.addf %9, %11 : vector<16x16xf32>
    %c0_11 = arith.constant 0 : index
    %c0_12 = arith.constant 0 : index
    %13 = vector.load %arg6[%c0_11, %c0_12] : memref<16x16xf32, #tpu.memory_space<vmem>>, vector<16x16xf32>
    tpu.vector_store %arg6[%c0_11, %c0_12], %12 {strides = array<i32>} : memref<16x16xf32, #tpu.memory_space<vmem>>, vector<16x16xf32>,
    return
  }
  func.func @transform_0(%arg0: i32) -> (i32, i32) {
    %c0_i32 = arith.constant 0 : i32
    %c0_i32_0 = arith.constant 0 : i32
    return %arg0, %c0_i32 : i32, i32
  }
  func.func @transform_1(%arg0: i32) -> (i32, i32) {
    %c0_i32 = arith.constant 0 : i32
    %c0_i32_0 = arith.constant 0 : i32
    %c0_i32_1 = arith.constant 0 : i32
    return %c0_i32, %c0_i32_0 : i32, i32
  }
  func.func @transform_2(%arg0: i32) -> (i32, i32) {
    %c0_i32 = arith.constant 0 : i32
    %c0_i32_0 = arith.constant 0 : i32
    %c0_i32_1 = arith.constant 0 : i32
    return %c0_i32, %c0_i32_0 : i32, i32
  }
  func.func @transform_3(%arg0: i32) -> (i32, i32) {
    %c0_i32 = arith.constant 0 : i32
    %c0_i32_0 = arith.constant 0 : i32
    %c0_i32_1 = arith.constant 0 : i32
    return %c0_i32, %c0_i32_0 : i32, i32
  }
  func.func @transform_4(%arg0: i32) -> (i32, i32) {
    %c0_i32 = arith.constant 0 : i32
    %c0_i32_0 = arith.constant 0 : i32
    %c0_i32_1 = arith.constant 0 : i32
    return %c0_i32, %c0_i32_0 : i32, i32
  }
  func.func @transform_5(%arg0: i32) -> (i32, i32) {
    %c0_i32 = arith.constant 0 : i32
    %c0_i32_0 = arith.constant 0 : i32
    return %arg0, %c0_i32 : i32, i32
  }
}

</mosaic_0001>

<llo_original>
// kernel: _forward_jit.1
$region0: #{_forward_jit.1}
  #allocation0 [shape = 'u32[]', space=smem, size = 0x4, offset = 0x4, fixed_abs, tag = 'smem constant byte address 0x4 - core index']
  #allocation1 [shape = 'u32[144,128]{1,0:T(1,128)}', space=vmem, size = 0x12000, scoped, tag = 'internal scratch']
  %s0 = inlined_call_operand.vmem [shape: f32[32,32], index: 0, kind: input, shape index: {}]
  %s1 = inlined_call_operand.vmem [shape: f32[32,128], index: 1, kind: input, shape index: {}]
  %s2 = inlined_call_operand.vmem [shape: f32[1,128], index: 2, kind: input, shape index: {}]
  %s3 = inlined_call_operand.vmem [shape: f32[128,16], index: 3, kind: input, shape index: {}]
  %s4 = inlined_call_operand.vmem [shape: f32[1,16], index: 4, kind: input, shape index: {}]
  %s5 = inlined_call_operand.vmem [shape: f32[32,16], index: 5, kind: output, shape index: {}]
  %s6 = sld [smem:[#allocation0]]
  $region53: #{_forward_jit.1} parent=0
    _
  %s8 = ssub.s32 1, %s6
  %s9 = scalar_select 0, %s8, %s6
  loop: start=0, step=1, limit=4
  $region2: #{_forward_jit.1} parent=0 // loop_pre_header
    _
  $region3: #{_forward_jit.1} parent=0 // loop_header
    %s11 = sphi 0, %s15
    %p12 = scmp.ge.s32.totalorder %s11, 4
    %s21 = sphi 0, %s23
    %s24 = sphi 0, %s21
    %s25 = sphi 0, %s24
    %s41 = sphi 0, %s25
    %s45 = sphi 0, %s45
    %s47 = sphi 0, %s45
    %s48 = sphi 0, %s47
    %s62 = sphi 0, %s48
    %s66 = sphi 0, %s66
    %s68 = sphi 0, %s66
    %s69 = sphi 0, %s68
    %s83 = sphi 0, %s69
    %s87 = sphi 0, %s87
    %s89 = sphi 0, %s87
    %s90 = sphi 0, %s89
    %s104 = sphi 0, %s90
    %s108 = sphi 0, %s108
    %s110 = sphi 0, %s108
    %s111 = sphi 0, %s110
    %s125 = sphi 0, %s111
    %s131 = sphi 0, %s133
    %s134 = sphi 0, %s131
    %s135 = sphi 0, %s134
    %s151 = sphi 0, %s135
  $region4: #{_forward_jit.1} parent=0 // loop_header_branch
    %14 = sbr.rel (%p12) target = $region8
  $region5: #{_forward_jit.1} parent=0 // loop_body
    %s16 = ssub.s32 %s11, 1
    %s17 = ssub.s32 %s11, 2
    %s18 = sadd.s32 %s11, 1
    %s19 = ssub.s32 %s11, %s18
    %p20 = scmp.eq.s32.totalorder %s19, 0
    %s22 = sadd.s32 %s21, 1
    %s23 = scalar_select %p20, %s21, %s22
    %p26 = pneg %p20
    %p27 = scmp.eq.s32.totalorder %s11, 1
    %p28 = por %p26, %p27
    %p29 = scmp.ne.s32.totalorder %s21, %s24
    %p30 = scmp.eq.s32.totalorder %s11, 0
    %p31 = por %p29, %p30
    %p32 = scmp.ne.s32.totalorder %s21, %s24
    %p33 = scmp.eq.s32.totalorder %s16, 1
    %p34 = por %p32, %p33
    %p35 = scmp.ne.s32.totalorder %s24, %s25
    %p36 = scmp.eq.s32.totalorder %s16, 0
    %p37 = por %p35, %p36
    %p38 = scmp.ne.s32.totalorder %s24, %s25
    %p39 = scmp.eq.s32.totalorder %s17, 1
    %p40 = por %p38, %p39
    %p42 = scmp.ne.s32.totalorder %s25, %s41
    %p43 = scmp.eq.s32.totalorder %s17, 0
    %p44 = por %p42, %p43
    %s46 = sadd.s32 %s45, 1
    %p49 = scmp.eq.s32.totalorder %s11, 1
    %p50 = scmp.ne.s32.totalorder %s45, %s47
    %p51 = scmp.eq.s32.totalorder %s11, 0
    %p52 = por %p50, %p51
    %p53 = scmp.ne.s32.totalorder %s45, %s47
    %p54 = scmp.eq.s32.totalorder %s16, 1
    %p55 = por %p53, %p54
    %p56 = scmp.ne.s32.totalorder %s47, %s48
    %p57 = scmp.eq.s32.totalorder %s16, 0
    %p58 = por %p56, %p57
    %p59 = scmp.ne.s32.totalorder %s47, %s48
    %p60 = scmp.eq.s32.totalorder %s17, 1
    %p61 = por %p59, %p60
    %p63 = scmp.ne.s32.totalorder %s48, %s62
    %p64 = scmp.eq.s32.totalorder %s17, 0
    %p65 = por %p63, %p64
    %s67 = sadd.s32 %s66, 1
    %p70 = scmp.eq.s32.totalorder %s11, 1
    %p71 = scmp.ne.s32.totalorder %s66, %s68
    %p72 = scmp.eq.s32.totalorder %s11, 0
    %p73 = por %p71, %p72
    %p74 = scmp.ne.s32.totalorder %s66, %s68
    %p75 = scmp.eq.s32.totalorder %s16, 1
    %p76 = por %p74, %p75
    %p77 = scmp.ne.s32.totalorder %s68, %s69
    %p78 = scmp.eq.s32.totalorder %s16, 0
    %p79 = por %p77, %p78
    %p80 = scmp.ne.s32.totalorder %s68, %s69
    %p81 = scmp.eq.s32.totalorder %s17, 1
    %p82 = por %p80, %p81
    %p84 = scmp.ne.s32.totalorder %s69, %s83
    %p85 = scmp.eq.s32.totalorder %s17, 0
    %p86 = por %p84, %p85
    %s88 = sadd.s32 %s87, 1
    %p91 = scmp.eq.s32.totalorder %s11, 1
    %p92 = scmp.ne.s32.totalorder %s87, %s89
    %p93 = scmp.eq.s32.totalorder %s11, 0
    %p94 = por %p92, %p93
    %p95 = scmp.ne.s32.totalorder %s87, %s89
    %p96 = scmp.eq.s32.totalorder %s16, 1
    %p97 = por %p95, %p96
    %p98 = scmp.ne.s32.totalorder %s89, %s90
    %p99 = scmp.eq.s32.totalorder %s16, 0
    %p100 = por %p98, %p99
    %p101 = scmp.ne.s32.totalorder %s89, %s90
    %p102 = scmp.eq.s32.totalorder %s17, 1
    %p103 = por %p101, %p102
    %p105 = scmp.ne.s32.totalorder %s90, %s104
    %p106 = scmp.eq.s32.totalorder %s17, 0
    %p107 = por %p105, %p106
    %s109 = sadd.s32 %s108, 1
    %p112 = scmp.eq.s32.totalorder %s11, 1
    %p113 = scmp.ne.s32.totalorder %s108, %s110
    %p114 = scmp.eq.s32.totalorder %s11, 0
    %p115 = por %p113, %p114
    %p116 = scmp.ne.s32.totalorder %s108, %s110
    %p117 = scmp.eq.s32.totalorder %s16, 1
    %p118 = por %p116, %p117
    %p119 = scmp.ne.s32.totalorder %s110, %s111
    %p120 = scmp.eq.s32.totalorder %s16, 0
    %p121 = por %p119, %p120
    %p122 = scmp.ne.s32.totalorder %s110, %s111
    %p123 = scmp.eq.s32.totalorder %s17, 1
    %p124 = por %p122, %p123
    %p126 = scmp.ne.s32.totalorder %s111, %s125
    %p127 = scmp.eq.s32.totalorder %s17, 0
    %p128 = por %p126, %p127
    %s129 = ssub.s32 %s11, %s18
    %p130 = scmp.eq.s32.totalorder %s129, 0
    %s132 = sadd.s32 %s131, 1
    %s133 = scalar_select %p130, %s131, %s132
    %p136 = pneg %p130
    %p137 = scmp.eq.s32.totalorder %s11, 1
    %p138 = por %p136, %p137
    %p139 = scmp.ne.s32.totalorder %s131, %s134
    %p140 = scmp.eq.s32.totalorder %s11, 0
    %p141 = por %p139, %p140
    %p142 = scmp.ne.s32.totalorder %s131, %s134
    %p143 = scmp.eq.s32.totalorder %s16, 1
    %p144 = por %p142, %p143
    %p145 = scmp.ne.s32.totalorder %s134, %s135
    %p146 = scmp.eq.s32.totalorder %s16, 0
    %p147 = por %p145, %p146
    %p148 = scmp.ne.s32.totalorder %s134, %s135
    %p149 = scmp.eq.s32.totalorder %s17, 1
    %p150 = por %p148, %p149
    %p152 = scmp.ne.s32.totalorder %s135, %s151
    %p153 = scmp.eq.s32.totalorder %s17, 0
    %p154 = por %p152, %p153
    %p155 = scmp.le.s32.totalorder 1, %s11
    %p156 = scmp.lt.s32.totalorder %s11, 3
    %p157 = pnand %p155, %p156
    %p158 = pneg %p157
    // Predicated region
    $region9: #{_forward_jit.1} parent=5 // pred_check
      _
    $region10: #{_forward_jit.1} parent=5 // pred_check_branch
      %160 = sbr.rel (%p157) target = $region12
    $region11: #{_forward_jit.1} parent=5 // pred_region
      %s161 = ssub.s32 %s11, 1
      // Predicated region
      $region13: #{_forward_jit.1} parent=11 // pred_check
        %p162 = pneg %p58
      $region14: #{_forward_jit.1} parent=11 // pred_check_branch
        %164 = sbr.rel (%p162) target = $region16
      $region15: #{_forward_jit.1} parent=11 // pred_region
        _
      $region16: #{_forward_jit.1} parent=11 // pred_fallthru
        _
      // Predicated region
      $region17: #{_forward_jit.1} parent=11 // pred_check
        %p165 = pneg %p79
      $region18: #{_forward_jit.1} parent=11 // pred_check_branch
        %167 = sbr.rel (%p165) target = $region20
      $region19: #{_forward_jit.1} parent=11 // pred_region
        _
      $region20: #{_forward_jit.1} parent=11 // pred_fallthru
        _
      // Predicated region
      $region21: #{_forward_jit.1} parent=11 // pred_check
        %p168 = pneg %p100
      $region22: #{_forward_jit.1} parent=11 // pred_check_branch
        %170 = sbr.rel (%p168) target = $region24
      $region23: #{_forward_jit.1} parent=11 // pred_region
        _
      $region24: #{_forward_jit.1} parent=11 // pred_fallthru
        _
      // Predicated region
      $region25: #{_forward_jit.1} parent=11 // pred_check
        %p171 = pneg %p121
      $region26: #{_forward_jit.1} parent=11 // pred_check_branch
        %173 = sbr.rel (%p171) target = $region28
      $region27: #{_forward_jit.1} parent=11 // pred_region
        _
      $region28: #{_forward_jit.1} parent=11 // pred_fallthru
        _
    $region12: #{_forward_jit.1} parent=5 // pred_fallthru
      _
    %p174 = scmp.lt.s32.totalorder %s11, 2
    // Predicated region
    $region29: #{_forward_jit.1} parent=5 // pred_check
      %p175 = pneg %p174
    $region30: #{_forward_jit.1} parent=5 // pred_check_branch
      %177 = sbr.rel (%p175) target = $region32
    $region31: #{_forward_jit.1} parent=5 // pred_region
      // Predicated region
      $region33: #{_forward_jit.1} parent=31 // pred_check
        %p178 = pneg %p31
      $region34: #{_forward_jit.1} parent=31 // pred_check_branch
        %180 = sbr.rel (%p178) target = $region36
      $region35: #{_forward_jit.1} parent=31 // pred_region
        %s181 = smul.u32 2, %s11
        %p182 = scmp.lt.s32.totalorder %s181, 3
        %s183 = scalar_select %p182, %s181, 3
        %s184 = smul.addr %s183, 8
        %s185 = scalar_lea.vmem %s0, %s184
        %s186 = smul.u32 2, %s11
      $region36: #{_forward_jit.1} parent=31 // pred_fallthru
        _
    $region32: #{_forward_jit.1} parent=5 // pred_fallthru
      _
    %p187 = scmp.le.s32.totalorder 1, %s11
    %p188 = scmp.lt.s32.totalorder %s11, 3
    %p189 = pnand %p187, %p188
    %p190 = pneg %p189
    // Predicated region
    $region37: #{_forward_jit.1} parent=5 // pred_check
      _
    $region38: #{_forward_jit.1} parent=5 // pred_check_branch
      %192 = sbr.rel (%p189) target = $region40
    $region39: #{_forward_jit.1} parent=5 // pred_region
      %s193 = ssub.s32 %s11, 1
      %s194 = smul.u32 2, %s16
      %p195 = scmp.lt.s32.totalorder %s194, 3
      %s196 = scalar_select %p195, %s194, 3
      %s197 = smul.addr %s196, 8
      %s198 = scalar_lea.vmem %s0, %s197
      %p199 = pneg %p37
      %p200 = pneg %p34
      %p201 = pneg %p58
      %p202 = pneg %p55
      %p203 = pneg %p79
      %p204 = pneg %p76
      %p205 = pneg %p100
      %p206 = pneg %p97
      %p207 = pneg %p121
      %p208 = pneg %p118
      %p209 = pneg %p147
      %p210 = pneg %p144
      %s211 = smul.u32 2, %s16
      %p212 = scmp.lt.s32.totalorder %s211, 3
      %s213 = scalar_select %p212, %s211, 3
      %s214 = smul.addr %s213, 8
      %s215 = scalar_lea.vmem %s5, %s214
      %s216 = smul.u32 2, %s16
      %p217 = scmp.lt.s32.totalorder %s216, 3
      %s218 = scalar_select %p217, %s216, 3
      %s219 = smul.addr %s218, 8
      %s220 = scalar_lea.vmem %s0, %s219
      %s221 = smul.u32 2, %s16
      %s222 = smul.u32 2, %s16
      %p223 = scmp.lt.s32.totalorder %s222, 3
      %s224 = scalar_select %p223, %s222, 3
      %s225 = smul.addr %s224, 8
      %s226 = scalar_lea.vmem %s5, %s225
      %s227 = smul.u32 2, %s16
      %v228 = vld [vmem:[%s220] sm:$0xff]
      %v229 = vld [vmem:[%s220 + $0x8] sm:$0xff]
      %v230 = vld [vmem:[%s1] sm:$0xff]
      %v231 = vld [vmem:[%s1 + $0x8] sm:$0xff]
      %v232 = vld [vmem:[%s1 + $0x10] sm:$0xff]
      %v233 = vld [vmem:[%s1 + $0x18] sm:$0xff]
      %v234 = vld [vmem:[%s2] sm:$0x1]
      %v236 = vlaneseq
      %v237 = vshrl.u32 %v236, 7
      %v238 = vsub.s32 0, %v237
      %v239 = vrot.slane %v234, %v238
      %vm241 = vcmask 261120
      %v243 = vsel %vm241, %v228, 0
      %v246 = vsel %vm241, %v229, 0
      %248 = vmatprep.subr.mxu0 0.0
      %249 = vmatpush1.msra.mxu0 %v230
      %250 = vmatprep.subr.mxu0 0.0
      %251 = vmatpush1.msra.mxu0 %v231
      %252 = vmatprep.subr.mxu0 0.0
      %253 = vmatpush1.msra.mxu0 %v232
      %254 = vmatprep.subr.mxu0 0.0
      %255 = vmatpush1.msra.mxu0 %v233
      %256 = vmatprep.subr.mxu0 0.0
      %257 = vmatpush1.msra.mxu0 0.0
      %258 = vmatprep.subr.mxu0 0.0
      %259 = vmatpush1.msra.mxu0 0.0
      %260 = vmatprep.subr.mxu0 0.0
      %261 = vmatpush1.msra.mxu0 0.0
      %262 = vmatprep.subr.mxu0 0.0
      %263 = vmatpush1.msra.mxu0 0.0
      %264 = vmatprep.subr.mxu0 0.0
      %265 = vmatpush1.msra.mxu0 0.0
      %266 = vmatprep.subr.mxu0 0.0
      %267 = vmatpush1.msra.mxu0 0.0
      %268 = vmatprep.subr.mxu0 0.0
      %269 = vmatpush1.msra.mxu0 0.0
      %270 = vmatprep.subr.mxu0 0.0
      %271 = vmatpush1.msra.mxu0 0.0
      %272 = vmatprep.subr.mxu0 0.0
      %273 = vmatpush1.msra.mxu0 0.0
      %274 = vmatprep.subr.mxu0 0.0
      %275 = vmatpush1.msra.mxu0 0.0
      %276 = vmatprep.subr.mxu0 0.0
      %277 = vmatpush1.msra.mxu0 0.0
      %278 = vmatprep.subr.mxu0 0.0
      %279 = vmatpush1.msra.mxu0 0.0
      %280 = vmatprep.subr.mxu0 0.0
      %281 = vmatpush1.msra.mxu0 0.0
      %282 = vmatprep.subr.mxu0 0.0
      %283 = vmatpush1.msra.mxu0 0.0
      %284 = vmatprep.subr.mxu0 0.0
      %285 = vmatpush1.msra.mxu0 0.0
      %286 = vmatprep.subr.mxu0 0.0
      %287 = vmatpush1.msra.mxu0 0.0
      %288 = vmatprep.subr.mxu0 0.0
      %289 = vmatpush1.msra.mxu0 0.0
      %290 = vmatprep.subr.mxu0 0.0
      %291 = vmatpush1.msra.mxu0 0.0
      %292 = vmatprep.subr.mxu0 0.0
      %293 = vmatpush1.msra.mxu0 0.0
      %294 = vmatprep.subr.mxu0 0.0
      %295 = vmatpush1.msra.mxu0 0.0
      %296 = vmatprep.subr.mxu0 0.0
      %297 = vmatpush1.msra.mxu0 0.0
      %298 = vmatprep.subr.mxu0 0.0
      %299 = vmatpush1.msra.mxu0 0.0
      %300 = vmatprep.subr.mxu0 0.0
      %301 = vmatpush1.msra.mxu0 0.0
      %302 = vmatprep.subr.mxu0 0.0
      %303 = vmatpush1.msra.mxu0 0.0
      %304 = vmatprep.subr.mxu0 0.0
      %305 = vmatpush1.msra.mxu0 0.0
      %306 = vmatprep.subr.mxu0 0.0
      %307 = vmatpush1.msra.mxu0 0.0
      %308 = vmatprep.subr.mxu0 0.0
      %309 = vmatpush1.msra.mxu0 0.0
      %310 = vmatprep.subr.mxu0 0.0
      %311 = vmatpush1.msra.mxu0 0.0
      %312 = vmatprep.mubr.f32.mxu0 0.0
      %313 = vmatmul.mubr.f32.gmra.mrb[0].mxu0 %v243
      %v314 = vpop.f32.mrb[0].mxu0
      %v315 = vadd.f32 %v239, %v314
      %v316 = vpop.f32.mrb[0].mxu0
      %317 = vmatprep.mubr.f32.mxu0 0.0
      %318 = vmatmul.mubr.f32.gmra.mrb[0].mxu0 %v246
      %v319 = vpop.f32.mrb[0].mxu0
      %v320 = vadd.f32 %v239, %v319
      %v321 = vpop.f32.mrb[0].mxu0
      %322 = vdwg.mxu0
      %v323 = vmax.f32 %v315, 0.0
      %v324 = vmax.f32 %v320, 0.0
      %v325 = vld [vmem:[%s3] sm:$0xff]
      %v326 = vld [vmem:[%s3 + $0x8] sm:$0xff]
      %v327 = vld [vmem:[%s3 + $0x10] sm:$0xff]
      %v328 = vld [vmem:[%s3 + $0x18] sm:$0xff]
      %v329 = vld [vmem:[%s3 + $0x20] sm:$0xff]
      %v330 = vld [vmem:[%s3 + $0x28] sm:$0xff]
      %v331 = vld [vmem:[%s3 + $0x30] sm:$0xff]
      %v332 = vld [vmem:[%s3 + $0x38] sm:$0xff]
      %v333 = vld [vmem:[%s3 + $0x40] sm:$0xff]
      %v334 = vld [vmem:[%s3 + $0x48] sm:$0xff]
      %v335 = vld [vmem:[%s3 + $0x50] sm:$0xff]
      %v336 = vld [vmem:[%s3 + $0x58] sm:$0xff]
      %v337 = vld [vmem:[%s3 + $0x60] sm:$0xff]
      %v338 = vld [vmem:[%s3 + $0x68] sm:$0xff]
      %v339 = vld [vmem:[%s3 + $0x70] sm:$0xff]
      %v340 = vld [vmem:[%s3 + $0x78] sm:$0xff]
      %v341 = vld [vmem:[%s4] sm:$0x1]
      %v343 = vlaneseq
      %v344 = vshrl.u32 %v343, 7
      %v345 = vsub.s32 0, %v344
      %v346 = vrot.slane %v341, %v345
      %348 = vmatprep.subr.mxu0 0.0
      %349 = vmatpush1.msra.mxu0 %v325
      %350 = vmatprep.subr.mxu0 0.0
      %351 = vmatpush1.msra.mxu0 %v326
      %352 = vmatprep.subr.mxu0 0.0
      %353 = vmatpush1.msra.mxu0 %v327
      %354 = vmatprep.subr.mxu0 0.0
      %355 = vmatpush1.msra.mxu0 %v328
      %356 = vmatprep.subr.mxu0 0.0
      %357 = vmatpush1.msra.mxu0 %v329
      %358 = vmatprep.subr.mxu0 0.0
      %359 = vmatpush1.msra.mxu0 %v330
      %360 = vmatprep.subr.mxu0 0.0
      %361 = vmatpush1.msra.mxu0 %v331
      %362 = vmatprep.subr.mxu0 0.0
      %363 = vmatpush1.msra.mxu0 %v332
      %364 = vmatprep.subr.mxu0 0.0
      %365 = vmatpush1.msra.mxu0 %v333
      %366 = vmatprep.subr.mxu0 0.0
      %367 = vmatpush1.msra.mxu0 %v334
      %368 = vmatprep.subr.mxu0 0.0
      %369 = vmatpush1.msra.mxu0 %v335
      %370 = vmatprep.subr.mxu0 0.0
      %371 = vmatpush1.msra.mxu0 %v336
      %372 = vmatprep.subr.mxu0 0.0
      %373 = vmatpush1.msra.mxu0 %v337
      %374 = vmatprep.subr.mxu0 0.0
      %375 = vmatpush1.msra.mxu0 %v338
      %376 = vmatprep.subr.mxu0 0.0
      %377 = vmatpush1.msra.mxu0 %v339
      %378 = vmatprep.subr.mxu0 0.0
      %379 = vmatpush1.msra.mxu0 %v340
      %380 = vmatprep.subr.mxu0 0.0
      %381 = vmatpush1.msra.mxu0 0.0
      %382 = vmatprep.subr.mxu0 0.0
      %383 = vmatpush1.msra.mxu0 0.0
      %384 = vmatprep.subr.mxu0 0.0
      %385 = vmatpush1.msra.mxu0 0.0
      %386 = vmatprep.subr.mxu0 0.0
      %387 = vmatpush1.msra.mxu0 0.0
      %388 = vmatprep.subr.mxu0 0.0
      %389 = vmatpush1.msra.mxu0 0.0
      %390 = vmatprep.subr.mxu0 0.0
      %391 = vmatpush1.msra.mxu0 0.0
      %392 = vmatprep.subr.mxu0 0.0
      %393 = vmatpush1.msra.mxu0 0.0
      %394 = vmatprep.subr.mxu0 0.0
      %395 = vmatpush1.msra.mxu0 0.0
      %396 = vmatprep.subr.mxu0 0.0
      %397 = vmatpush1.msra.mxu0 0.0
      %398 = vmatprep.subr.mxu0 0.0
      %399 = vmatpush1.msra.mxu0 0.0
      %400 = vmatprep.subr.mxu0 0.0
      %401 = vmatpush1.msra.mxu0 0.0
      %402 = vmatprep.subr.mxu0 0.0
      %403 = vmatpush1.msra.mxu0 0.0
      %404 = vmatprep.subr.mxu0 0.0
      %405 = vmatpush1.msra.mxu0 0.0
      %406 = vmatprep.subr.mxu0 0.0
      %407 = vmatpush1.msra.mxu0 0.0
      %408 = vmatprep.subr.mxu0 0.0
      %409 = vmatpush1.msra.mxu0 0.0
      %410 = vmatprep.subr.mxu0 0.0
      %411 = vmatpush1.msra.mxu0 0.0
      %412 = vmatprep.mubr.f32.mxu0 0.0
      %413 = vmatmul.mubr.f32.gmra.mrb[0].mxu0 %v323
      %v414 = vpop.f32.mrb[0].mxu0
      %v415 = vadd.f32 %v346, %v414
      %v416 = vpop.f32.mrb[0].mxu0
      %417 = vmatprep.mubr.f32.mxu0 0.0
      %418 = vmatmul.mubr.f32.gmra.mrb[0].mxu0 %v324
      %v419 = vpop.f32.mrb[0].mxu0
      %v420 = vadd.f32 %v346, %v419
      %v421 = vpop.f32.mrb[0].mxu0
      %422 = vdwg.mxu0
      %vm423 = vcmask 130048
      %424 = vst.msk [vmem:[%s226] sm:$0xff] %vm423, %v415
      %425 = vst.msk [vmem:[%s226 + $0x8] sm:$0xff] %vm423, %v420
      %s426 = smul.u32 2, %s16
      %p427 = scmp.lt.s32.totalorder %s426, 3
      %s428 = scalar_select %p427, %s426, 3
      %s429 = smul.addr %s428, 8
      %s430 = scalar_lea.vmem %s5, %s429
      // Predicated region
      $region41: #{_forward_jit.1} parent=39 // pred_check
        %p431 = pneg %p144
      $region42: #{_forward_jit.1} parent=39 // pred_check_branch
        %433 = sbr.rel (%p431) target = $region44
      $region43: #{_forward_jit.1} parent=39 // pred_region
        %s434 = smul.u32 2, %s16
      $region44: #{_forward_jit.1} parent=39 // pred_fallthru
        _
    $region40: #{_forward_jit.1} parent=5 // pred_fallthru
      _
    %p435 = scmp.le.s32.totalorder 2, %s11
    // Predicated region
    $region45: #{_forward_jit.1} parent=5 // pred_check
      %p436 = pneg %p435
    $region46: #{_forward_jit.1} parent=5 // pred_check_branch
      %438 = sbr.rel (%p436) target = $region48
    $region47: #{_forward_jit.1} parent=5 // pred_region
      %s439 = ssub.s32 %s11, 2
      // Predicated region
      $region49: #{_forward_jit.1} parent=47 // pred_check
        %p440 = pneg %p150
      $region50: #{_forward_jit.1} parent=47 // pred_check_branch
        %442 = sbr.rel (%p440) target = $region52
      $region51: #{_forward_jit.1} parent=47 // pred_region
        %s443 = smul.u32 2, %s17
        %p444 = scmp.lt.s32.totalorder %s443, 3
        %s445 = scalar_select %p444, %s443, 3
        %s446 = smul.addr %s445, 8
        %s447 = scalar_lea.vmem %s5, %s446
      $region52: #{_forward_jit.1} parent=47 // pred_fallthru
        _
    $region48: #{_forward_jit.1} parent=5 // pred_fallthru
      _
  $region6: #{_forward_jit.1} parent=0 // loop_footer
    %s15 = sadd.s32 1, %s11
  $region7: #{_forward_jit.1} parent=0 // loop_footer_branch
    %10 = sbr.rel target = $region3
  $region8: #{_forward_jit.1} parent=0 // loop_exit
    _

</llo_original>
